<compile_context>
chip_gen: v6e
topology: v6e:2x2x1
jax: 0.10.0
libtpu: 0.0.40
codegen_flags: <defaults>
</compile_context>

<pallas_src>
import functools

import jax
import jax.numpy as jnp
from jax import lax
from jax.experimental import pallas as pl
from jax.experimental.pallas import tpu as pltpu

STATE_DIM = 5
HIDDEN = 128


def value_net_kernel(x_ref, w1_ref, b1_ref, w2_ref, b2_ref, o_ref, *,
                     chunk, compute_dtype):
    # x_ref:  (TB, S)      input tile (streamed, double-buffered)
    # w1_ref: (S, H)       fc1 weight, (in, out) layout (resident)
    # b1_ref: (1, H)       fc1 bias (resident)
    # w2_ref: (1, H)       fc2 weight as a broadcast row (resident)
    # b2_ref: (1, 1)       fc2 bias, SMEM scalar (f32)
    # o_ref:  (1, 1, TB)   lane-dense output tile
    tb = x_ref.shape[0]
    num_chunks = tb // chunk                    # static (chunk divides TB)

    w1 = w1_ref[...]
    b1 = b1_ref[...]
    w2 = w2_ref[...]
    b2 = b2_ref[0, 0]

    def body(c, carry):
        r = pl.multiple_of(c * chunk, chunk)
        xc = x_ref[pl.ds(r, chunk), :]          # (chunk, S)
        # fc1 on the MXU (internal f32 accumulate), result in compute_dtype.
        h = jnp.dot(xc, w1, preferred_element_type=compute_dtype)
        # bias + ReLU + fc2 row multiply on the VPU (bf16-packed when bf16).
        h = jnp.maximum(h + b1, 0.0)
        hw = h * w2
        # fc2: XLU cross-lane reduce, f32 accumulation. (The per-sublane
        # scalars are packed into a lane-dense (chunk,) vector for the store;
        # XLU has slack vs the VALU here.)
        v = jnp.sum(hw.astype(jnp.float32), axis=-1) + b2
        o_ref[0, 0, pl.ds(r, chunk)] = v.astype(o_ref.dtype)
        return carry

    lax.fori_loop(0, num_chunks, body, 0)


def _round_up(v, m):
    return ((v + m - 1) // m) * m


def value_net_forward(x, w1, b1, w2, b2, *, tile_batch=16384):
    """x: (B, state_dim) -> (B, 1) f32.  y = relu(x @ W1 + b1) @ W2 + b2."""
    batch, state_dim = x.shape
    hidden = w1.shape[1]

    # --- batch tile --------------------------------------------------------
    # TB is a multiple of 128 (lane-dense output stores). Large tiles amortize
    # the per-grid-step pipeline overhead; the cap keeps the lane-padded
    # (TB, 128)-f32 x double buffers (~1 KiB/row) well inside v7x's 64 MiB/TC.
    # Use >= 2 tiles when the batch allows so both TensorCores get work.
    cap = max(128, min(_round_up(int(tile_batch), 128), 16384))
    half = _round_up(pl.cdiv(batch, 2), 128)
    TB = max(128, min(cap, half))
    num_tiles = pl.cdiv(batch, TB)
    padded = num_tiles * TB

    # In-kernel compute chunk: largest 128-multiple power-of-two divisor of TB
    # capped at 1024, so the (chunk, hidden) temporaries stay ~0.5 MiB.
    chunk = 128
    while chunk * 2 <= 1024 and chunk * 2 <= TB and TB % (chunk * 2) == 0:
        chunk *= 2

    # --- dtypes -------------------------------------------------------------
    # bf16 path engages only when x is bf16 (both dot operands cast to bf16).
    # TODO(synk): keep x in f32 on v5e (no bf16 VALU there).
    use_bf16 = x.dtype == jnp.bfloat16
    compute_dtype = jnp.bfloat16 if use_bf16 else jnp.float32
    w1_c = w1.astype(compute_dtype)
    b1_row = b1.reshape(1, hidden).astype(compute_dtype)
    w2_row = w2.reshape(1, hidden).astype(compute_dtype)  # (H,1) -> (1,H) row
    b2_s = b2.reshape(1, 1).astype(jnp.float32)

    itemsize = jnp.dtype(x.dtype).itemsize
    cost = pl.CostEstimate(
        flops=2 * padded * state_dim * hidden + 3 * padded * hidden,
        transcendentals=0,
        bytes_accessed=batch * state_dim * itemsize + batch * 4
        + (state_dim * hidden + 2 * hidden + 1) * itemsize,
    )

    kernel = functools.partial(value_net_kernel, chunk=chunk,
                               compute_dtype=compute_dtype)

    out = pl.pallas_call(
        kernel,
        out_shape=jax.ShapeDtypeStruct((num_tiles, 1, TB), jnp.float32),
        grid=(num_tiles,),
        in_specs=[
            # x streamed; last partial block handled by Pallas' masked DMA
            # (no jnp.pad copy of the whole input).
            pl.BlockSpec((TB, state_dim), lambda i: (i, 0)),
            pl.BlockSpec((state_dim, hidden), lambda i: (0, 0)),   # W1 resident
            pl.BlockSpec((1, hidden), lambda i: (0, 0)),           # b1 resident
            pl.BlockSpec((1, hidden), lambda i: (0, 0)),           # W2 row resident
            pl.BlockSpec(memory_space=pltpu.MemorySpace.SMEM),     # b2 scalar
        ],
        out_specs=pl.BlockSpec((1, 1, TB), lambda i: (i, 0, 0)),
        compiler_params=pltpu.CompilerParams(
            dimension_semantics=("parallel",),   # shard batch tiles across TCs
            # big tiles exceed the scoped-VMEM defaults (16 MiB v5e / 32 MiB
            # v6e,v7x); 48 MiB fits all generations (v7x has 64 MiB/TC).
            vmem_limit_bytes=48 << 20,
        ),
        cost_estimate=cost,
    )(x, w1_c, b1_row, w2_row, b2_s)

    # Rows beyond `batch` in the last tile are garbage from the masked read;
    # slice them off immediately (never reduce over the padded buffer).
    return out.reshape(padded, 1)[:batch]


def init_params(key, state_dim=STATE_DIM, hidden=HIDDEN):
    """PyTorch-style uniform init: U(-1/sqrt(fan_in), 1/sqrt(fan_in))."""
    k1, k2, k3, k4 = jax.random.split(key, 4)
    bound1 = 1.0 / jnp.sqrt(jnp.float32(state_dim))
    bound2 = 1.0 / jnp.sqrt(jnp.float32(hidden))
    # stored already-transposed: (in, out)
    w1 = jax.random.uniform(k1, (state_dim, hidden), jnp.float32, -bound1, bound1)
    b1 = jax.random.uniform(k2, (1, hidden), jnp.float32, -bound1, bound1)
    w2 = jax.random.uniform(k3, (hidden, 1), jnp.float32, -bound2, bound2)
    b2 = jax.random.uniform(k4, (1, 1), jnp.float32, -bound2, bound2)
    return w1, b1, w2, b2


if __name__ == "__main__":
    key = jax.random.PRNGKey(0)
    k_params, k_x1, k_x2 = jax.random.split(key, 3)
    w1, b1, w2, b2 = init_params(k_params)

    def reference(x):
        return jnp.maximum(x @ w1 + b1, 0.0) @ w2 + b2

    # Small batch (single partial tile path).
    batch = 8
    x = jax.random.normal(k_x1, (batch, STATE_DIM), jnp.float32)
    out = jax.block_until_ready(value_net_forward(x, w1, b1, w2, b2))
    assert out.shape == (batch, 1)
    assert jnp.allclose(out, reference(x), atol=1e-5, rtol=1e-5)

    # Non-128-multiple batch spanning two tiles (multi-tile + masked last block).
    batch2 = 300
    x2 = jax.random.normal(k_x2, (batch2, STATE_DIM), jnp.float32)
    out2 = jax.block_until_ready(value_net_forward(x2, w1, b1, w2, b2))
    assert out2.shape == (batch2, 1)
    assert jnp.allclose(out2, reference(x2), atol=1e-5, rtol=1e-5)

    print("KERNEL_OK")
</pallas_src>

<mosaic_0001>
module attributes {stable_mosaic.version = 11 : i64} {
  func.func @value_net_kernel(%arg0: i32, %arg1: memref<128x5xf32, #tpu.memory_space<vmem>>, %arg2: memref<5x128xf32, #tpu.memory_space<vmem>>, %arg3: memref<1x128xf32, #tpu.memory_space<vmem>>, %arg4: memref<1x128xf32, #tpu.memory_space<vmem>>, %arg5: memref<1x1xf32, #tpu.memory_space<smem>>, %arg6: memref<1x1x128xf32, #tpu.memory_space<vmem>>) attributes {dimension_semantics = [#tpu.dimension_semantics<parallel>], iteration_bounds = array<i64: 1>, scalar_prefetch = 0 : i64, scratch_operands = 0 : i64, tpu.core_type = #tpu.core_type<tc>, window_params = [{transform_indices = @transform_0, window_bounds = array<i64: 128, 5>}, {pipeline_mode = #tpu.pipeline_mode<synchronous>, transform_indices = @transform_1, window_bounds = array<i64: 5, 128>}, {pipeline_mode = #tpu.pipeline_mode<synchronous>, transform_indices = @transform_2, window_bounds = array<i64: 1, 128>}, {pipeline_mode = #tpu.pipeline_mode<synchronous>, transform_indices = @transform_3, window_bounds = array<i64: 1, 128>}, {transform_indices = @transform_4, window_bounds = array<i64: 1, 1>}, {transform_indices = @transform_5, window_bounds = array<i64: 1, 1, 128>}]} {
    %c0 = arith.constant 0 : index
    %c0_0 = arith.constant 0 : index
    %0 = vector.load %arg2[%c0, %c0_0] : memref<5x128xf32, #tpu.memory_space<vmem>>, vector<5x128xf32>
    %c0_1 = arith.constant 0 : index
    %c0_2 = arith.constant 0 : index
    %1 = vector.load %arg3[%c0_1, %c0_2] : memref<1x128xf32, #tpu.memory_space<vmem>>, vector<1x128xf32>
    %c0_3 = arith.constant 0 : index
    %c0_4 = arith.constant 0 : index
    %2 = vector.load %arg4[%c0_3, %c0_4] : memref<1x128xf32, #tpu.memory_space<vmem>>, vector<1x128xf32>
    %c0_5 = arith.constant 0 : index
    %c0_6 = arith.constant 0 : index
    %3 = memref.load %arg5[%c0_5, %c0_6] : memref<1x1xf32, #tpu.memory_space<smem>>
    %c0_i32 = arith.constant 0 : i32
    %c128_i32 = arith.constant 128 : i32
    %4 = arith.muli %c0_i32, %c128_i32 : i32
    %5 = tpu.assume_multiple %4, 128 : i32
    %6 = arith.index_cast %5 : i32 to index
    %c0_7 = arith.constant 0 : index
    %7 = vector.load %arg1[%6, %c0_7] : memref<128x5xf32, #tpu.memory_space<vmem>>, vector<128x5xf32>
    %cst = arith.constant dense<0.000000e+00> : vector<128x128xf32>
    %8 = tpu.matmul %7, %0, %cst {dimension_numbers = #tpu.dot_dimension_numbers<[1], [0], [0], [1], [0, 0, 1, 1], [], []>} : vector<128x5xf32>, vector<5x128xf32>, vector<128x128xf32> -> vector<128x128xf32>
    %9 = vector.broadcast %1 : vector<1x128xf32> to vector<128x128xf32>
    %10 = arith.addf %8, %9 : vector<128x128xf32>
    %cst_8 = arith.constant 0.000000e+00 : f32
    %11 = vector.broadcast %cst_8 : f32 to vector<128x128xf32>
    %12 = arith.maximumf %10, %11 : vector<128x128xf32>
    %13 = vector.broadcast %2 : vector<1x128xf32> to vector<128x128xf32>
    %14 = arith.mulf %12, %13 : vector<128x128xf32>
    %cst_9 = arith.constant dense<0.000000e+00> : vector<128xf32>
    %15 = vector.multi_reduction <add>, %14, %cst_9 [1] : vector<128x128xf32> to vector<128xf32>
    %16 = vector.broadcast %3 : f32 to vector<128xf32>
    %17 = arith.addf %15, %16 : vector<128xf32>
    %c0_10 = arith.constant 0 : index
    %c0_11 = arith.constant 0 : index
    %18 = arith.index_cast %5 : i32 to index
    %19 = vector.load %arg6[%c0_10, %c0_11, %18] : memref<1x1x128xf32, #tpu.memory_space<vmem>>, vector<1x1x128xf32>
    %20 = vector.shape_cast %19 : vector<1x1x128xf32> to vector<128xf32>
    %21 = vector.shape_cast %17 : vector<128xf32> to vector<1x1x128xf32>
    tpu.vector_store %arg6[%c0_10, %c0_11, %18], %21 {strides = array<i32>} : memref<1x1x128xf32, #tpu.memory_space<vmem>>, vector<1x1x128xf32>,
    %c1_i32 = arith.constant 1 : i32
    return
  }
  func.func @transform_0(%arg0: i32) -> (i32, i32) {
    %c0_i32 = arith.constant 0 : i32
    %c0_i32_0 = arith.constant 0 : i32
    return %arg0, %c0_i32 : i32, i32
  }
  func.func @transform_1(%arg0: i32) -> (i32, i32) {
    %c0_i32 = arith.constant 0 : i32
    %c0_i32_0 = arith.constant 0 : i32
    %c0_i32_1 = arith.constant 0 : i32
    return %c0_i32, %c0_i32_0 : i32, i32
  }
  func.func @transform_2(%arg0: i32) -> (i32, i32) {
    %c0_i32 = arith.constant 0 : i32
    %c0_i32_0 = arith.constant 0 : i32
    %c0_i32_1 = arith.constant 0 : i32
    return %c0_i32, %c0_i32_0 : i32, i32
  }
  func.func @transform_3(%arg0: i32) -> (i32, i32) {
    %c0_i32 = arith.constant 0 : i32
    %c0_i32_0 = arith.constant 0 : i32
    %c0_i32_1 = arith.constant 0 : i32
    return %c0_i32, %c0_i32_0 : i32, i32
  }
  func.func @transform_4(%arg0: i32) -> (i32, i32) {
    %c0_i32 = arith.constant 0 : i32
    %c0_i32_0 = arith.constant 0 : i32
    %c0_i32_1 = arith.constant 0 : i32
    return %c0_i32, %c0_i32_0 : i32, i32
  }
  func.func @transform_5(%arg0: i32) -> (i32, i32, i32) {
    %c0_i32 = arith.constant 0 : i32
    %c0_i32_0 = arith.constant 0 : i32
    %c0_i32_1 = arith.constant 0 : i32
    return %arg0, %c0_i32, %c0_i32_0 : i32, i32, i32
  }
}

</mosaic_0001>

<llo_original>
// kernel: tpu_custom_call.1
$region0: #{tpu_custom_call.1}
  #allocation0 [shape = 'u32[]', space=smem, size = 0x4, offset = 0x4, fixed_abs, tag = 'smem constant byte address 0x4 - core index']
  #allocation1 [shape = 'u32[144,128]{1,0:T(1,128)}', space=vmem, size = 0x12000, scoped, tag = 'internal scratch']
  #allocation2 [shape = 'f32[1,1]{1,0:T(1,128)S(6)}', space=smem, size = 0x200, scoped, tag = 'scoped memory for tpu_custom_call.1']
  %s0 = inlined_call_operand.hbm [shape: f32[8,5], index: 0, kind: input, shape index: {}]
  %s1 = inlined_call_operand.hbm [shape: f32[5,128], index: 1, kind: input, shape index: {}]
  %s2 = inlined_call_operand.vmem [shape: f32[1,128], index: 2, kind: input, shape index: {}]
  %s3 = inlined_call_operand.vmem [shape: f32[1,128], index: 3, kind: input, shape index: {}]
  %s4 = inlined_call_operand.<no memory space> [shape: f32[1,1], index: 4, kind: input, shape index: {}]
  %s5 = inlined_call_operand.hbm [shape: f32[1,1,128], index: 5, kind: output, shape index: {}]
  %s6 = sld [smem:[#allocation0]]
  $region38: #{tpu_custom_call.1} parent=0
    _
  %s8 = ssub.s32 1, %s6
  %s9 = scalar_select 0, %s8, %s6
  %10 = sst [smem:[#allocation2]] %s4
  $region1: #{tpu_custom_call.1} parent=0
    #allocation3 [shape = 'u8[65536]{0}', space=vmem, size = 0x10000, scoped, tag = 'input window, operand 0, single buffered']
    #allocation4 [shape = 's32[1]{0}', space=sflag, size = 0x4, scoped, tag = 'scoped memory for tpu_custom_call.1']
    #allocation5 [shape = 's32[1]{0}', space=sflag, size = 0x4, scoped, tag = 'scoped memory for tpu_custom_call.1']
    #allocation6 [shape = 'u8[4096]{0}', space=vmem, size = 0x1000, scoped, tag = 'input window, operand 1, single buffered']
    #allocation7 [shape = 's32[1]{0}', space=sflag, size = 0x4, scoped, tag = 'scoped memory for tpu_custom_call.1']
    #allocation8 [shape = 'u8[512]{0}', space=vmem, size = 0x400, scoped, tag = 'output window, operand 0, single buffered']
    %11 = vsyncpa [#allocation4], 0
    %12 = vsyncpa [#allocation7], 0
    %13 = vsyncpa [#allocation5], 0
    // Predicated region
    $region2: #{tpu_custom_call.1} parent=1 // pred_check
      _
    $region3: #{tpu_custom_call.1} parent=1 // pred_check_branch
      %15 = sbr.rel (0) target = $region5
    $region4: #{tpu_custom_call.1} parent=1 // pred_region
      %s17 = ssub.s32 2048, 128
      %18 = vsyncadd [#allocation4], %s17
      %s19 = sshll.u32 [#allocation3], 4
      %s20 = int_to_ptr.vmem [resolvable:$true] %s19
      %25 = dma.hbm_to_vmem [thread:$0]  %s0, 128, %s20, [#allocation4], 128, 128, 8
    $region5: #{tpu_custom_call.1} parent=1 // pred_fallthru
      _
    // Predicated region
    $region6: #{tpu_custom_call.1} parent=1 // pred_check
      _
    $region7: #{tpu_custom_call.1} parent=1 // pred_check_branch
      %27 = sbr.rel (0) target = $region9
    $region8: #{tpu_custom_call.1} parent=1 // pred_region
      %s29 = ssub.s32 128, 128
      %30 = vsyncadd [#allocation7], %s29
      %s32 = sshll.u32 [#allocation6], 4
      %s33 = int_to_ptr.vmem [resolvable:$true] %s32
      %35 = dma.hbm_to_vmem [thread:$0]  %s1, 128, %s33, [#allocation7]
    $region9: #{tpu_custom_call.1} parent=1 // pred_fallthru
      _
    // Predicated region
    $region10: #{tpu_custom_call.1} parent=1 // pred_check
      _
    $region11: #{tpu_custom_call.1} parent=1 // pred_check_branch
      %37 = sbr.rel (0) target = $region13
    $region12: #{tpu_custom_call.1} parent=1 // pred_region
      _
    $region13: #{tpu_custom_call.1} parent=1 // pred_fallthru
      _
    // Predicated region
    $region14: #{tpu_custom_call.1} parent=1 // pred_check
      _
    $region15: #{tpu_custom_call.1} parent=1 // pred_check_branch
      %39 = sbr.rel (0) target = $region17
    $region16: #{tpu_custom_call.1} parent=1 // pred_region
      _
    $region17: #{tpu_custom_call.1} parent=1 // pred_fallthru
      _
    // Predicated region
    $region18: #{tpu_custom_call.1} parent=1 // pred_check
      _
    $region19: #{tpu_custom_call.1} parent=1 // pred_check_branch
      %41 = sbr.rel (0) target = $region21
    $region20: #{tpu_custom_call.1} parent=1 // pred_region
      _
    $region21: #{tpu_custom_call.1} parent=1 // pred_fallthru
      _
    // Predicated region
    $region22: #{tpu_custom_call.1} parent=1 // pred_check
      _
    $region23: #{tpu_custom_call.1} parent=1 // pred_check_branch
      %43 = sbr.rel (0) target = $region25
    $region24: #{tpu_custom_call.1} parent=1 // pred_region
      %44 = dma.done [#allocation4], 2048
    $region25: #{tpu_custom_call.1} parent=1 // pred_fallthru
      _
    // Predicated region
    $region26: #{tpu_custom_call.1} parent=1 // pred_check
      _
    $region27: #{tpu_custom_call.1} parent=1 // pred_check_branch
      %46 = sbr.rel (0) target = $region29
    $region28: #{tpu_custom_call.1} parent=1 // pred_region
      %47 = dma.done [#allocation7], 128
    $region29: #{tpu_custom_call.1} parent=1 // pred_fallthru
      _
    %v48 = vld [vmem:[#allocation6] sm:$0x1f]
    %v49 = vld [vmem:[%s2] sm:$0x1]
    %v50 = vld [vmem:[%s3] sm:$0x1]
    %s51 = sld [smem:[#allocation2]]
    %v52 = vld [vmem:[#allocation3] sm:$0xff]
    %v53 = vld [vmem:[#allocation3 + $0x8] sm:$0xff]
    %v54 = vld [vmem:[#allocation3 + $0x10] sm:$0xff]
    %v55 = vld [vmem:[#allocation3 + $0x18] sm:$0xff]
    %v56 = vld [vmem:[#allocation3 + $0x20] sm:$0xff]
    %v57 = vld [vmem:[#allocation3 + $0x28] sm:$0xff]
    %v58 = vld [vmem:[#allocation3 + $0x30] sm:$0xff]
    %v59 = vld [vmem:[#allocation3 + $0x38] sm:$0xff]
    %v60 = vld [vmem:[#allocation3 + $0x40] sm:$0xff]
    %v61 = vld [vmem:[#allocation3 + $0x48] sm:$0xff]
    %v62 = vld [vmem:[#allocation3 + $0x50] sm:$0xff]
    %v63 = vld [vmem:[#allocation3 + $0x58] sm:$0xff]
    %v64 = vld [vmem:[#allocation3 + $0x60] sm:$0xff]
    %v65 = vld [vmem:[#allocation3 + $0x68] sm:$0xff]
    %v66 = vld [vmem:[#allocation3 + $0x70] sm:$0xff]
    %v67 = vld [vmem:[#allocation3 + $0x78] sm:$0xff]
    %v69 = vlaneseq
    %v70 = vshrl.u32 %v69, 7
    %v71 = vsub.s32 0, %v70
    %v72 = vrot.slane %v49, %v71
    %vm74 = vcmask 39936
    %v76 = vsel %vm74, %v52, 0
    %v79 = vsel %vm74, %v53, 0
    %v82 = vsel %vm74, %v54, 0
    %v85 = vsel %vm74, %v55, 0
    %v88 = vsel %vm74, %v56, 0
    %v91 = vsel %vm74, %v57, 0
    %v94 = vsel %vm74, %v58, 0
    %v97 = vsel %vm74, %v59, 0
    %v100 = vsel %vm74, %v60, 0
    %v103 = vsel %vm74, %v61, 0
    %v106 = vsel %vm74, %v62, 0
    %v109 = vsel %vm74, %v63, 0
    %v112 = vsel %vm74, %v64, 0
    %v115 = vsel %vm74, %v65, 0
    %v118 = vsel %vm74, %v66, 0
    %v121 = vsel %vm74, %v67, 0
    %vm123 = vcmask 1044480
    %v125 = vsel %vm123, %v48, 0
    %127 = vmatprep.subr.mxu0 0.0
    %128 = vmatpush1.msra.mxu0 0.0
    %129 = vmatprep.subr.mxu0 0.0
    %130 = vmatpush1.msra.mxu0 0.0
    %131 = vmatprep.subr.mxu0 0.0
    %132 = vmatpush1.msra.mxu0 0.0
    %133 = vmatprep.subr.mxu0 0.0
    %134 = vmatpush1.msra.mxu0 0.0
    %135 = vmatprep.subr.mxu0 0.0
    %136 = vmatpush1.msra.mxu0 0.0
    %137 = vmatprep.subr.mxu0 0.0
    %138 = vmatpush1.msra.mxu0 0.0
    %139 = vmatprep.subr.mxu0 0.0
    %140 = vmatpush1.msra.mxu0 0.0
    %141 = vmatprep.subr.mxu0 0.0
    %142 = vmatpush1.msra.mxu0 0.0
    %143 = vmatprep.subr.mxu0 0.0
    %144 = vmatpush1.msra.mxu0 0.0
    %145 = vmatprep.subr.mxu0 0.0
    %146 = vmatpush1.msra.mxu0 0.0
    %147 = vmatprep.subr.mxu0 0.0
    %148 = vmatpush1.msra.mxu0 0.0
    %149 = vmatprep.subr.mxu0 0.0
    %150 = vmatpush1.msra.mxu0 0.0
    %151 = vmatprep.subr.mxu0 0.0
    %152 = vmatpush1.msra.mxu0 0.0
    %153 = vmatprep.subr.mxu0 0.0
    %154 = vmatpush1.msra.mxu0 0.0
    %155 = vmatprep.subr.mxu0 0.0
    %156 = vmatpush1.msra.mxu0 0.0
    %157 = vmatprep.subr.mxu0 0.0
    %158 = vmatpush1.msra.mxu0 %v125
    %159 = vmatprep.subr.mxu0 0.0
    %160 = vmatpush2.msra.mxu0 0.0
    %161 = vmatprep.subr.mxu0 0.0
    %162 = vmatpush2.msra.mxu0 0.0
    %163 = vmatprep.subr.mxu0 0.0
    %164 = vmatpush2.msra.mxu0 0.0
    %165 = vmatprep.subr.mxu0 0.0
    %166 = vmatpush2.msra.mxu0 0.0
    %167 = vmatprep.subr.mxu0 0.0
    %168 = vmatpush2.msra.mxu0 0.0
    %169 = vmatprep.subr.mxu0 0.0
    %170 = vmatpush2.msra.mxu0 0.0
    %171 = vmatprep.subr.mxu0 0.0
    %172 = vmatpush2.msra.mxu0 0.0
    %173 = vmatprep.subr.mxu0 0.0
    %174 = vmatpush2.msra.mxu0 0.0
    %175 = vmatprep.subr.mxu0 0.0
    %176 = vmatpush2.msra.mxu0 0.0
    %177 = vmatprep.subr.mxu0 0.0
    %178 = vmatpush2.msra.mxu0 0.0
    %179 = vmatprep.subr.mxu0 0.0
    %180 = vmatpush2.msra.mxu0 0.0
    %181 = vmatprep.subr.mxu0 0.0
    %182 = vmatpush2.msra.mxu0 0.0
    %183 = vmatprep.subr.mxu0 0.0
    %184 = vmatpush2.msra.mxu0 0.0
    %185 = vmatprep.subr.mxu0 0.0
    %186 = vmatpush2.msra.mxu0 0.0
    %187 = vmatprep.subr.mxu0 0.0
    %188 = vmatpush2.msra.mxu0 0.0
    %189 = vmatprep.subr.mxu0 0.0
    %190 = vmatpush2.msra.mxu0 0.0
    %191 = vmatprep.mubr.f32.mxu0 0.0
    %192 = vmatmul.mubr.f32.gmra.mxu0 %v76
    %v193 = vpop.f32.mrf.mxu0
    %v194 = vadd.f32 %v72, %v193
    %v195 = vpop.f32.mrf.mxu0
    %196 = vmatprep.mubr.f32.mxu0 0.0
    %197 = vmatmul.mubr.f32.gmra.mxu0 %v79
    %v198 = vpop.f32.mrf.mxu0
    %v199 = vadd.f32 %v72, %v198
    %v200 = vpop.f32.mrf.mxu0
    %201 = vmatprep.mubr.f32.mxu0 0.0
    %202 = vmatmul.mubr.f32.gmra.mxu0 %v82
    %v203 = vpop.f32.mrf.mxu0
    %v204 = vadd.f32 %v72, %v203
    %v205 = vpop.f32.mrf.mxu0
    %206 = vmatprep.mubr.f32.mxu0 0.0
    %207 = vmatmul.mubr.f32.gmra.mxu0 %v85
    %v208 = vpop.f32.mrf.mxu0
    %v209 = vadd.f32 %v72, %v208
    %v210 = vpop.f32.mrf.mxu0
    %211 = vmatprep.mubr.f32.mxu0 0.0
    %212 = vmatmul.mubr.f32.gmra.mxu0 %v88
    %v213 = vpop.f32.mrf.mxu0
    %v214 = vadd.f32 %v72, %v213
    %v215 = vpop.f32.mrf.mxu0
    %216 = vmatprep.mubr.f32.mxu0 0.0
    %217 = vmatmul.mubr.f32.gmra.mxu0 %v91
    %v218 = vpop.f32.mrf.mxu0
    %v219 = vadd.f32 %v72, %v218
    %v220 = vpop.f32.mrf.mxu0
    %221 = vmatprep.mubr.f32.mxu0 0.0
    %222 = vmatmul.mubr.f32.gmra.mxu0 %v94
    %v223 = vpop.f32.mrf.mxu0
    %v224 = vadd.f32 %v72, %v223
    %v225 = vpop.f32.mrf.mxu0
    %226 = vmatprep.mubr.f32.mxu0 0.0
    %227 = vmatmul.mubr.f32.gmra.mxu0 %v97
    %v228 = vpop.f32.mrf.mxu0
    %v229 = vadd.f32 %v72, %v228
    %v230 = vpop.f32.mrf.mxu0
    %231 = vmatprep.mubr.f32.mxu0 0.0
    %232 = vmatmul.mubr.f32.gmra.mxu0 %v100
    %v233 = vpop.f32.mrf.mxu0
    %v234 = vadd.f32 %v72, %v233
    %v235 = vpop.f32.mrf.mxu0
    %236 = vmatprep.mubr.f32.mxu0 0.0
    %237 = vmatmul.mubr.f32.gmra.mxu0 %v103
    %v238 = vpop.f32.mrf.mxu0
    %v239 = vadd.f32 %v72, %v238
    %v240 = vpop.f32.mrf.mxu0
    %241 = vmatprep.mubr.f32.mxu0 0.0
    %242 = vmatmul.mubr.f32.gmra.mxu0 %v106
    %v243 = vpop.f32.mrf.mxu0
    %v244 = vadd.f32 %v72, %v243
    %v245 = vpop.f32.mrf.mxu0
    %246 = vmatprep.mubr.f32.mxu0 0.0
    %247 = vmatmul.mubr.f32.gmra.mxu0 %v109
    %v248 = vpop.f32.mrf.mxu0
    %v249 = vadd.f32 %v72, %v248
    %v250 = vpop.f32.mrf.mxu0
    %251 = vmatprep.mubr.f32.mxu0 0.0
    %252 = vmatmul.mubr.f32.gmra.mxu0 %v112
    %v253 = vpop.f32.mrf.mxu0
    %v254 = vadd.f32 %v72, %v253
    %v255 = vpop.f32.mrf.mxu0
    %256 = vmatprep.mubr.f32.mxu0 0.0
    %257 = vmatmul.mubr.f32.gmra.mxu0 %v115
    %v258 = vpop.f32.mrf.mxu0
    %v259 = vadd.f32 %v72, %v258
    %v260 = vpop.f32.mrf.mxu0
    %261 = vmatprep.mubr.f32.mxu0 0.0
    %262 = vmatmul.mubr.f32.gmra.mxu0 %v118
    %v263 = vpop.f32.mrf.mxu0
    %v264 = vadd.f32 %v72, %v263
    %v265 = vpop.f32.mrf.mxu0
    %266 = vmatprep.mubr.f32.mxu0 0.0
    %267 = vmatmul.mubr.f32.gmra.mxu0 %v121
    %v268 = vpop.f32.mrf.mxu0
    %v269 = vadd.f32 %v72, %v268
    %v270 = vpop.f32.mrf.mxu0
    %271 = vdwg.mxu0
    %v272 = vmax.f32 %v194, 0.0
    %v273 = vmax.f32 %v199, 0.0
    %v274 = vmax.f32 %v204, 0.0
    %v275 = vmax.f32 %v209, 0.0
    %v276 = vmax.f32 %v214, 0.0
    %v277 = vmax.f32 %v219, 0.0
    %v278 = vmax.f32 %v224, 0.0
    %v279 = vmax.f32 %v229, 0.0
    %v280 = vmax.f32 %v234, 0.0
    %v281 = vmax.f32 %v239, 0.0
    %v282 = vmax.f32 %v244, 0.0
    %v283 = vmax.f32 %v249, 0.0
    %v284 = vmax.f32 %v254, 0.0
    %v285 = vmax.f32 %v259, 0.0
    %v286 = vmax.f32 %v264, 0.0
    %v287 = vmax.f32 %v269, 0.0
    %v289 = vlaneseq
    %v290 = vshrl.u32 %v289, 7
    %v291 = vsub.s32 0, %v290
    %v292 = vrot.slane %v50, %v291
    %v294 = vmul.f32 %v272, %v292
    %v295 = vmul.f32 %v273, %v292
    %v296 = vmul.f32 %v274, %v292
    %v297 = vmul.f32 %v275, %v292
    %v298 = vmul.f32 %v276, %v292
    %v299 = vmul.f32 %v277, %v292
    %v300 = vmul.f32 %v278, %v292
    %v301 = vmul.f32 %v279, %v292
    %v302 = vmul.f32 %v280, %v292
    %v303 = vmul.f32 %v281, %v292
    %v304 = vmul.f32 %v282, %v292
    %v305 = vmul.f32 %v283, %v292
    %v306 = vmul.f32 %v284, %v292
    %v307 = vmul.f32 %v285, %v292
    %v308 = vmul.f32 %v286, %v292
    %v309 = vmul.f32 %v287, %v292
    %310 = vadd.xlane.f32.xlu0 %v294
    %v311 = vpop.xlane.xlu0 %310
    %312 = vadd.xlane.f32.xlu0 %v295
    %v313 = vpop.xlane.xlu0 %312
    %314 = vadd.xlane.f32.xlu0 %v296
    %v315 = vpop.xlane.xlu0 %314
    %316 = vadd.xlane.f32.xlu0 %v297
    %v317 = vpop.xlane.xlu0 %316
    %318 = vadd.xlane.f32.xlu0 %v298
    %v319 = vpop.xlane.xlu0 %318
    %320 = vadd.xlane.f32.xlu0 %v299
    %v321 = vpop.xlane.xlu0 %320
    %322 = vadd.xlane.f32.xlu0 %v300
    %v323 = vpop.xlane.xlu0 %322
    %324 = vadd.xlane.f32.xlu0 %v301
    %v325 = vpop.xlane.xlu0 %324
    %326 = vadd.xlane.f32.xlu0 %v302
    %v327 = vpop.xlane.xlu0 %326
    %328 = vadd.xlane.f32.xlu0 %v303
    %v329 = vpop.xlane.xlu0 %328
    %330 = vadd.xlane.f32.xlu0 %v304
    %v331 = vpop.xlane.xlu0 %330
    %332 = vadd.xlane.f32.xlu0 %v305
    %v333 = vpop.xlane.xlu0 %332
    %334 = vadd.xlane.f32.xlu0 %v306
    %v335 = vpop.xlane.xlu0 %334
    %336 = vadd.xlane.f32.xlu0 %v307
    %v337 = vpop.xlane.xlu0 %336
    %338 = vadd.xlane.f32.xlu0 %v308
    %v339 = vpop.xlane.xlu0 %338
    %340 = vadd.xlane.f32.xlu0 %v309
    %v341 = vpop.xlane.xlu0 %340
    %v342 = vstv %s51
    %v343 = vadd.f32 %v311, %v342
    %v344 = vadd.f32 %v313, %v342
    %v345 = vadd.f32 %v315, %v342
    %v346 = vadd.f32 %v317, %v342
    %v347 = vadd.f32 %v319, %v342
    %v348 = vadd.f32 %v321, %v342
    %v349 = vadd.f32 %v323, %v342
    %v350 = vadd.f32 %v325, %v342
    %v351 = vadd.f32 %v327, %v342
    %v352 = vadd.f32 %v329, %v342
    %v353 = vadd.f32 %v331, %v342
    %v354 = vadd.f32 %v333, %v342
    %v355 = vadd.f32 %v335, %v342
    %v356 = vadd.f32 %v337, %v342
    %v357 = vadd.f32 %v339, %v342
    %v358 = vadd.f32 %v341, %v342
    %v375 = vlaneseq
    %v376 = vand.u32 %v375, 127
    %v377 = vlaneseq
    %v378 = vshrl.u32 %v377, 7
    %v379 = vsub.s32 %v376, %v378
    %v380 = vrot.slane %v343, %v379
    %v381 = vadd.s32 %v376, 4294967288
    %v382 = vlaneseq
    %v383 = vshrl.u32 %v382, 7
    %v384 = vsub.s32 %v381, %v383
    %v385 = vrot.slane %v344, %v384
    %vm386 = vcmask 130112
    %v387 = vsel %vm386, %v385, %v380
    %v388 = vadd.s32 %v376, 4294967280
    %v389 = vlaneseq
    %v390 = vshrl.u32 %v389, 7
    %v391 = vsub.s32 %v388, %v390
    %v392 = vrot.slane %v345, %v391
    %vm393 = vcmask 195712
    %v394 = vsel %vm393, %v392, %v387
    %v395 = vadd.s32 %v376, 4294967272
    %v396 = vlaneseq
    %v397 = vshrl.u32 %v396, 7
    %v398 = vsub.s32 %v395, %v397
    %v399 = vrot.slane %v346, %v398
    %vm400 = vcmask 261312
    %v401 = vsel %vm400, %v399, %v394
    %v402 = vadd.s32 %v376, 4294967264
    %v403 = vlaneseq
    %v404 = vshrl.u32 %v403, 7
    %v405 = vsub.s32 %v402, %v404
    %v406 = vrot.slane %v347, %v405
    %vm407 = vcmask 326912
    %v408 = vsel %vm407, %v406, %v401
    %v409 = vadd.s32 %v376, 4294967256
    %v410 = vlaneseq
    %v411 = vshrl.u32 %v410, 7
    %v412 = vsub.s32 %v409, %v411
    %v413 = vrot.slane %v348, %v412
    %vm414 = vcmask 392512
    %v415 = vsel %vm414, %v413, %v408
    %v416 = vadd.s32 %v376, 4294967248
    %v417 = vlaneseq
    %v418 = vshrl.u32 %v417, 7
    %v419 = vsub.s32 %v416, %v418
    %v420 = vrot.slane %v349, %v419
    %vm421 = vcmask 458112
    %v422 = vsel %vm421, %v420, %v415
    %v423 = vadd.s32 %v376, 4294967240
    %v424 = vlaneseq
    %v425 = vshrl.u32 %v424, 7
    %v426 = vsub.s32 %v423, %v425
    %v427 = vrot.slane %v350, %v426
    %vm428 = vcmask 523712
    %v429 = vsel %vm428, %v427, %v422
    %v430 = vadd.s32 %v376, 4294967232
    %v431 = vlaneseq
    %v432 = vshrl.u32 %v431, 7
    %v433 = vsub.s32 %v430, %v432
    %v434 = vrot.slane %v351, %v433
    %vm435 = vcmask 589312
    %v436 = vsel %vm435, %v434, %v429
    %v437 = vadd.s32 %v376, 4294967224
    %v438 = vlaneseq
    %v439 = vshrl.u32 %v438, 7
    %v440 = vsub.s32 %v437, %v439
    %v441 = vrot.slane %v352, %v440
    %vm442 = vcmask 654912
    %v443 = vsel %vm442, %v441, %v436
    %v444 = vadd.s32 %v376, 4294967216
    %v445 = vlaneseq
    %v446 = vshrl.u32 %v445, 7
    %v447 = vsub.s32 %v444, %v446
    %v448 = vrot.slane %v353, %v447
    %vm449 = vcmask 720512
    %v450 = vsel %vm449, %v448, %v443
    %v451 = vadd.s32 %v376, 4294967208
    %v452 = vlaneseq
    %v453 = vshrl.u32 %v452, 7
    %v454 = vsub.s32 %v451, %v453
    %v455 = vrot.slane %v354, %v454
    %vm456 = vcmask 786112
    %v457 = vsel %vm456, %v455, %v450
    %v458 = vadd.s32 %v376, 4294967200
    %v459 = vlaneseq
    %v460 = vshrl.u32 %v459, 7
    %v461 = vsub.s32 %v458, %v460
    %v462 = vrot.slane %v355, %v461
    %vm463 = vcmask 851712
    %v464 = vsel %vm463, %v462, %v457
    %v465 = vadd.s32 %v376, 4294967192
    %v466 = vlaneseq
    %v467 = vshrl.u32 %v466, 7
    %v468 = vsub.s32 %v465, %v467
    %v469 = vrot.slane %v356, %v468
    %vm470 = vcmask 917312
    %v471 = vsel %vm470, %v469, %v464
    %v472 = vadd.s32 %v376, 4294967184
    %v473 = vlaneseq
    %v474 = vshrl.u32 %v473, 7
    %v475 = vsub.s32 %v472, %v474
    %v476 = vrot.slane %v357, %v475
    %vm477 = vcmask 982912
    %v478 = vsel %vm477, %v476, %v471
    %v479 = vadd.s32 %v376, 4294967176
    %v480 = vlaneseq
    %v481 = vshrl.u32 %v480, 7
    %v482 = vsub.s32 %v479, %v481
    %v483 = vrot.slane %v358, %v482
    %vm484 = vcmask 1048512
    %v485 = vsel %vm484, %v483, %v478
    %487 = vst [vmem:[#allocation8] sm:$0x1] %v485
    // Predicated region
    $region30: #{tpu_custom_call.1} parent=1 // pred_check
      _
    $region31: #{tpu_custom_call.1} parent=1 // pred_check_branch
      %489 = sbr.rel (0) target = $region33
    $region32: #{tpu_custom_call.1} parent=1 // pred_region
      %s491 = ssub.s32 16, 16
      %492 = vsyncadd [#allocation5], %s491
      %s494 = sshll.u32 [#allocation8], 4
      %s495 = int_to_ptr.vmem [resolvable:$true] %s494
      %497 = dma.vmem_to_hbm [thread:$0]  %s495, 16, %s5, [#allocation5]
    $region33: #{tpu_custom_call.1} parent=1 // pred_fallthru
      _
    // Predicated region
    $region34: #{tpu_custom_call.1} parent=1 // pred_check
      _
    $region35: #{tpu_custom_call.1} parent=1 // pred_check_branch
      %499 = sbr.rel (0) target = $region37
    $region36: #{tpu_custom_call.1} parent=1 // pred_region
      %500 = dma.done [#allocation5], 16
    $region37: #{tpu_custom_call.1} parent=1 // pred_fallthru
      _
    %501 = vsyncpa [#allocation4], 1
    %502 = vsyncpa [#allocation7], 1
    %503 = vsyncpa [#allocation5], 1

</llo_original>
